<compile_context>
chip_gen: v7x
topology: tpu7x:2x2x1
jax: 0.10.0
libtpu: 0.0.40
codegen_flags: <defaults>
</compile_context>

<pallas_src>
import jax
import jax.numpy as jnp
from jax.experimental import pallas as pl
from jax.experimental.pallas import tpu as pltpu


# Number of concurrent DMA descriptors used on the forced copy path.
_NUM_DMA_CHUNKS = 8


def _make_chunked_copy_kernel(chunks):
    """Kernel factory: copy `chunks` = [(start, size), ...] along axis 0.

    All chunk boundaries are static Python ints, so each `.at[pl.ds(...)]`
    is a zero-cost ref view and each chunk is one HBM->HBM DMA descriptor.
    """

    def kernel(x_hbm, o_hbm, sem):
        copies = []
        for k, (start, size) in enumerate(chunks):
            cp = pltpu.make_async_copy(
                x_hbm.at[pl.ds(start, size)],
                o_hbm.at[pl.ds(start, size)],
                sem.at[k],
            )
            cp.start()
            copies.append(cp)
        # Wait for all outstanding DMAs (issued concurrently above).
        for cp in copies:
            cp.wait()

    return kernel


def _pallas_identity_copy(x, num_chunks=_NUM_DMA_CHUNKS):
    """Bit-exact identity copy of `x` via concurrent HBM->HBM DMAs.

    Gridless, no VMEM staging (keeps v7x's 64 MiB VMEM untouched), no
    tiling constraints -- works for any shape / dtype, including totals that
    are not multiples of 128.
    """
    if x.size == 0:
        return x  # nothing to move

    # Chunk along the leading dimension (static, computed at trace time).
    lead = x.shape[0] if x.ndim > 0 else 1
    k = max(1, min(num_chunks, lead))
    base, rem = divmod(lead, k)
    chunks = []
    start = 0
    for i in range(k):
        size = base + (1 if i < rem else 0)
        chunks.append((start, size))
        start += size

    if x.ndim == 0:
        # Degenerate scalar: single full-array DMA, no slicing.
        def scalar_kernel(x_hbm, o_hbm, sem):
            cp = pltpu.make_async_copy(x_hbm, o_hbm, sem)
            cp.start()
            cp.wait()

        kernel = scalar_kernel
        sem_shape = ()
    else:
        kernel = _make_chunked_copy_kernel(chunks)
        sem_shape = (k,)

    nbytes = x.size * x.dtype.itemsize
    # NOTE: if the caller can donate `x`, `input_output_aliases={0: 0}` with a
    # pltpu.touch body would make this zero-traffic (view semantics allow it).
    return pl.pallas_call(
        kernel,
        out_shape=jax.ShapeDtypeStruct(x.shape, x.dtype),
        in_specs=[pl.BlockSpec(memory_space=pl.ANY)],
        out_specs=pl.BlockSpec(memory_space=pl.ANY),
        scratch_shapes=[pltpu.SemaphoreType.DMA(sem_shape)],
        cost_estimate=pl.CostEstimate(
            flops=0, transcendentals=0, bytes_accessed=2 * nbytes
        ),
    )(x)


def reshape_forward(x, target_shape, force_pallas=False):
    """Equivalent of torch Reshape(*target_shape).forward(x) == x.view(shape).

    Default path: metadata-only row-major reshape (matches torch .view element
    order for contiguous tensors; supports -1).  Only when `force_pallas=True`
    do the bytes move through the Pallas HBM->HBM DMA copy -- and since the
    reshape is applied first, the kernel output already has the target shape
    (no post-kernel relayout).
    """
    y = jnp.reshape(x, target_shape)
    if force_pallas:
        y = _pallas_identity_copy(y)
    return y


if __name__ == "__main__":
    key = jax.random.PRNGKey(0)
    # Input consistent with a conv3d autoencoder feature map being flattened
    # before a dense layer: x of shape (N, C, H, W) -> (N, C*H*W).
    x = jax.random.normal(key, (2, 4, 16, 16), dtype=jnp.float32)
    target_shape = (2, 4 * 16 * 16)  # Reshape(2, 1024)
    y_ref = jnp.reshape(x, target_shape)

    # 1) Exercise the Pallas DMA path explicitly.
    y = reshape_forward(x, target_shape, force_pallas=True)
    y = jax.block_until_ready(y)
    assert y.shape == tuple(target_shape)
    assert y.dtype == x.dtype
    assert bool(jnp.array_equal(y, y_ref))

    # 2) Default path: metadata-only, no kernel, no HBM traffic.
    y_fast = jax.block_until_ready(reshape_forward(x, target_shape))
    assert bool(jnp.array_equal(y_fast, y_ref))

    # 3) Shape-generality on the forced path: totals not a multiple of 128,
    #    odd dims, bf16 dtype, -1 inference -- no padding, no asserts.
    key2 = jax.random.PRNGKey(1)
    x2 = jax.random.normal(key2, (3, 5, 7, 9), dtype=jnp.bfloat16)
    y2 = jax.block_until_ready(reshape_forward(x2, (3, -1), force_pallas=True))
    assert y2.shape == (3, 315)
    assert bool(jnp.array_equal(y2, jnp.reshape(x2, (3, 315))))

    print("KERNEL_OK")
</pallas_src>

<mosaic_0001>
module attributes {stable_mosaic.version = 11 : i64} {
  func.func @kernel(%arg0: memref<2x1024xf32, #tpu.memory_space<any>>, %arg1: memref<2x1024xf32, #tpu.memory_space<any>>, %arg2: memref<2x!tpu.dma_semaphore, #tpu.memory_space<semaphore_mem>>) attributes {dimension_semantics = [], scalar_prefetch = 0 : i64, scratch_operands = 1 : i64, tpu.core_type = #tpu.core_type<tc>} {
    %c0_i32 = arith.constant 0 : i32
    %c0_i32_0 = arith.constant 0 : i32
    %c0_i32_1 = arith.constant 0 : i32
    %0 = tpu.memref_slice %arg0[%c0_i32_0, %c0_i32_1] : memref<2x1024xf32, #tpu.memory_space<any>> -> memref<1x1024xf32, #tpu.memory_space<any>>
    %c0_i32_2 = arith.constant 0 : i32
    %c0_i32_3 = arith.constant 0 : i32
    %1 = tpu.memref_slice %arg1[%c0_i32_2, %c0_i32_3] : memref<2x1024xf32, #tpu.memory_space<any>> -> memref<1x1024xf32, #tpu.memory_space<any>>
    %2 = tpu.memref_slice %arg2[%c0_i32] : memref<2x!tpu.dma_semaphore, #tpu.memory_space<semaphore_mem>> -> memref<1x!tpu.dma_semaphore, #tpu.memory_space<semaphore_mem>>
    %3 = tpu.memref_squeeze %2 : memref<1x!tpu.dma_semaphore, #tpu.memory_space<semaphore_mem>> -> memref<!tpu.dma_semaphore, #tpu.memory_space<semaphore_mem>>
    tpu.enqueue_dma source(%0 : memref<1x1024xf32, #tpu.memory_space<any>>) target(%1 : memref<1x1024xf32, #tpu.memory_space<any>>) target_semaphore(%3 : memref<!tpu.dma_semaphore, #tpu.memory_space<semaphore_mem>>)
    %c1_i32 = arith.constant 1 : i32
    %c1_i32_4 = arith.constant 1 : i32
    %c0_i32_5 = arith.constant 0 : i32
    %4 = tpu.memref_slice %arg0[%c1_i32_4, %c0_i32_5] : memref<2x1024xf32, #tpu.memory_space<any>> -> memref<1x1024xf32, #tpu.memory_space<any>>
    %c1_i32_6 = arith.constant 1 : i32
    %c0_i32_7 = arith.constant 0 : i32
    %5 = tpu.memref_slice %arg1[%c1_i32_6, %c0_i32_7] : memref<2x1024xf32, #tpu.memory_space<any>> -> memref<1x1024xf32, #tpu.memory_space<any>>
    %6 = tpu.memref_slice %arg2[%c1_i32] : memref<2x!tpu.dma_semaphore, #tpu.memory_space<semaphore_mem>> -> memref<1x!tpu.dma_semaphore, #tpu.memory_space<semaphore_mem>>
    %7 = tpu.memref_squeeze %6 : memref<1x!tpu.dma_semaphore, #tpu.memory_space<semaphore_mem>> -> memref<!tpu.dma_semaphore, #tpu.memory_space<semaphore_mem>>
    tpu.enqueue_dma source(%4 : memref<1x1024xf32, #tpu.memory_space<any>>) target(%5 : memref<1x1024xf32, #tpu.memory_space<any>>) target_semaphore(%7 : memref<!tpu.dma_semaphore, #tpu.memory_space<semaphore_mem>>)
    %c0_i32_8 = arith.constant 0 : i32
    %c0_i32_9 = arith.constant 0 : i32
    %c0_i32_10 = arith.constant 0 : i32
    %8 = tpu.memref_slice %arg0[%c0_i32_9, %c0_i32_10] : memref<2x1024xf32, #tpu.memory_space<any>> -> memref<1x1024xf32, #tpu.memory_space<any>>
    %c0_i32_11 = arith.constant 0 : i32
    %c0_i32_12 = arith.constant 0 : i32
    %9 = tpu.memref_slice %arg1[%c0_i32_11, %c0_i32_12] : memref<2x1024xf32, #tpu.memory_space<any>> -> memref<1x1024xf32, #tpu.memory_space<any>>
    %10 = tpu.memref_slice %arg2[%c0_i32_8] : memref<2x!tpu.dma_semaphore, #tpu.memory_space<semaphore_mem>> -> memref<1x!tpu.dma_semaphore, #tpu.memory_space<semaphore_mem>>
    %11 = tpu.memref_squeeze %10 : memref<1x!tpu.dma_semaphore, #tpu.memory_space<semaphore_mem>> -> memref<!tpu.dma_semaphore, #tpu.memory_space<semaphore_mem>>
    tpu.wait_dma2 semaphore(%11 : memref<!tpu.dma_semaphore, #tpu.memory_space<semaphore_mem>>) src(%8 : memref<1x1024xf32, #tpu.memory_space<any>>) dst(%9 : memref<1x1024xf32, #tpu.memory_space<any>>)
    %c1_i32_13 = arith.constant 1 : i32
    %c1_i32_14 = arith.constant 1 : i32
    %c0_i32_15 = arith.constant 0 : i32
    %12 = tpu.memref_slice %arg0[%c1_i32_14, %c0_i32_15] : memref<2x1024xf32, #tpu.memory_space<any>> -> memref<1x1024xf32, #tpu.memory_space<any>>
    %c1_i32_16 = arith.constant 1 : i32
    %c0_i32_17 = arith.constant 0 : i32
    %13 = tpu.memref_slice %arg1[%c1_i32_16, %c0_i32_17] : memref<2x1024xf32, #tpu.memory_space<any>> -> memref<1x1024xf32, #tpu.memory_space<any>>
    %14 = tpu.memref_slice %arg2[%c1_i32_13] : memref<2x!tpu.dma_semaphore, #tpu.memory_space<semaphore_mem>> -> memref<1x!tpu.dma_semaphore, #tpu.memory_space<semaphore_mem>>
    %15 = tpu.memref_squeeze %14 : memref<1x!tpu.dma_semaphore, #tpu.memory_space<semaphore_mem>> -> memref<!tpu.dma_semaphore, #tpu.memory_space<semaphore_mem>>
    tpu.wait_dma2 semaphore(%15 : memref<!tpu.dma_semaphore, #tpu.memory_space<semaphore_mem>>) src(%12 : memref<1x1024xf32, #tpu.memory_space<any>>) dst(%13 : memref<1x1024xf32, #tpu.memory_space<any>>)
    return
  }
}

</mosaic_0001>

<llo_original>
// kernel: tpu_custom_call.1
$region0: #{tpu_custom_call.1}
  #allocation0 [shape = 'u32[]', space=smem, size = 0x4, offset = 0x4, fixed_abs, tag = 'smem constant byte address 0x4 - core index']
  #allocation1 [shape = 'u32[144,128]{1,0:T(1,128)}', space=vmem, size = 0x12000, scoped, tag = 'internal scratch']
  #allocation2 [shape = 's32[2]{0}', space=sflag, size = 0x8, scoped, tag = 'scratch operand']
  #allocation3 [shape = 's32[]', space=sflag, size = 0x4, offset = 0, fixed_abs, tag = 'sflag constant byte address 0x0 - dummy sync flag']
  #allocation5 [shape = 's32[]', space=sflag, size = 0x4, offset = 0, fixed_abs, tag = 'sflag constant byte address 0x0 - dummy sync flag']
  %s0 = inlined_call_operand.hbm [shape: f32[2,1024], index: 0, kind: input, shape index: {}]
  %s1 = inlined_call_operand.hbm [shape: f32[2,1024], index: 1, kind: output, shape index: {}]
  %s2 = sld [smem:[#allocation0]]
  $region2: #{tpu_custom_call.1} parent=0
    _
  %s4 = ssub.s32 1, %s2
  %s5 = scalar_select 0, %s4, %s2
  $region1: #{tpu_custom_call.1} parent=0
    #allocation4 [shape = 'u32[3]{0}', space=smem, size = 0xc, scoped, tag = 'DMA stride descriptor']
    #allocation6 [shape = 'u32[3]{0}', space=smem, size = 0xc, scoped, tag = 'DMA stride descriptor']
    %s7 = sshll.u32 1, 14
    %s8 = sxor.u32 4294967295, %s7
    %s11 = sshll.u32 3, 24
    %s12 = sxor.u32 4294967295, %s11
    %s13 = sand.u32 0, %s12
    %s15 = sor.u32 %s13, 0
    %18 = sst [smem:[#allocation4]] 32
    %s19 = scalar_lea.smem [#allocation4], 1
    %20 = sst [smem:[%s19]] 32
    %s21 = scalar_lea.smem [#allocation4], 2
    %22 = sst [smem:[%s21]] 1
    %24 = dma.general %s0, 128, %s1, [#allocation2], [#allocation3], [#allocation4], %s15, 0
    %s25 = scalar_lea.hbm %s0, 16
    %s26 = scalar_lea.hbm %s1, 16
    %s27 = scalar_lea.sflag [#allocation2], 1
    %s29 = sshll.u32 1, 14
    %s30 = sxor.u32 4294967295, %s29
    %s33 = sshll.u32 3, 24
    %s34 = sxor.u32 4294967295, %s33
    %s35 = sand.u32 0, %s34
    %s37 = sor.u32 %s35, 0
    %40 = sst [smem:[#allocation6]] 32
    %s41 = scalar_lea.smem [#allocation6], 1
    %42 = sst [smem:[%s41]] 32
    %s43 = scalar_lea.smem [#allocation6], 2
    %44 = sst [smem:[%s43]] 1
    %46 = dma.general %s25, 128, %s26, %s27, [#allocation5], [#allocation6], %s37, 0
    %s47 = smul.u32 1, 8
    %s48 = sshll.u32 %s47, 4
    %49 = dma.done [#allocation2], %s48
    %s50 = sshll.u32 %s47, 4
    %51 = dma.done %s27, %s50
  %52 = vsyncmov [#allocation2]
  %s53 = vpop.sfrf %52
  %p54 = scmp.eq.s32.totalorder %s53, 0
  %p55 = pneg %p54
  %57 = shalt.err (%p55)
  %s58 = scalar_lea.sflag [#allocation2], 1
  %59 = vsyncmov %s58
  %s60 = vpop.sfrf %59
  %p61 = scmp.eq.s32.totalorder %s60, 0
  %p62 = pneg %p61
  %64 = shalt.err (%p62)

</llo_original>
